<compile_context>
chip_gen: v7x
topology: tpu7x:2x2x1
jax: 0.10.0
libtpu: 0.0.40
codegen_flags: <defaults>
</compile_context>

<pallas_src>
import functools

import jax
import jax.numpy as jnp
from jax.experimental import pallas as pl
from jax.experimental.pallas import tpu as pltpu


LANE = 128       # channel padding target (lane-dense, MXU-friendly)
SUBLANE_T = 16   # time-tile granularity (bf16 sublane packing)


# ------------------------------ small helpers ---------------------------------


def _round_up(n, m):
    return ((n + m - 1) // m) * m


def _pad_to(a, shape):
    pads = [(0, s - d) for d, s in zip(a.shape, shape)]
    return jnp.pad(a, pads)


def _pick_time_tile(L, min_tile, target):
    """Largest divisor of L that is a multiple of 16 (or L itself), <= target, >= min_tile."""
    divs = [d for d in range(1, L + 1) if L % d == 0 and (d % SUBLANE_T == 0 or d == L)]
    ok = [d for d in divs if d >= min_tile]
    if not ok:
        return L
    under = [d for d in ok if d <= target]
    return max(under) if under else min(ok)


# ----------------------------- Pallas kernel ----------------------------------


def _temporal_block_kernel(*refs, Lt, pad, dilation, ksize, has_downsample, use_carry):
    """Fused TemporalBlock for one (batch, time-tile) grid point.

    refs (in order):
      x_cur     (Lt, Cin_p)          current time tile of x (bf16)
      w1        (k, Cin_p, Cout_p)   bf16 (weight_norm folded, channel-padded)
      b1        (1, Cout_p)          f32
      w2        (k, Cout_p, Cout_p)  bf16
      b2        (1, Cout_p)          f32
      [wd, bd]  optional 1x1 downsample (bf16 / f32)
      o_ref     (Lt, Cout_p)         bf16 output tile
      xe_ref    (Lt + pad, Cin_p)    bf16 VMEM: causal x window, carries tail across tiles
      h1e_ref   (Lt + pad, Cout_p)   bf16 VMEM: conv1+ReLU window, carries tail across tiles
    """
    x_ref, w1_ref, b1_ref, w2_ref, b2_ref = refs[:5]
    i = 5
    if has_downsample:
        wd_ref, bd_ref = refs[i:i + 2]
        i += 2
    o_ref, xe_ref, h1e_ref = refs[i:i + 3]

    t = pl.program_id(1)
    cin = xe_ref.shape[-1]
    cout = h1e_ref.shape[-1]

    # ---- causal left context (zeros at t=0; carried tails from the previous tile) ----
    if pad > 0:
        if use_carry:
            @pl.when(t == 0)
            def _init():
                xe_ref[pl.ds(0, pad), :] = jnp.zeros((pad, cin), xe_ref.dtype)
                h1e_ref[pl.ds(0, pad), :] = jnp.zeros((pad, cout), h1e_ref.dtype)

            @pl.when(t != 0)
            def _carry():
                # last `pad` rows written during tile t-1 become this tile's halo
                xe_ref[pl.ds(0, pad), :] = xe_ref[pl.ds(Lt, pad), :]
                h1e_ref[pl.ds(0, pad), :] = h1e_ref[pl.ds(Lt, pad), :]
        else:
            xe_ref[pl.ds(0, pad), :] = jnp.zeros((pad, cin), xe_ref.dtype)
            h1e_ref[pl.ds(0, pad), :] = jnp.zeros((pad, cout), h1e_ref.dtype)

    x_cur = x_ref[...]                               # (Lt, Cin_p) bf16
    xe_ref[pl.ds(pad, Lt), :] = x_cur

    # ---- conv1 (dilated, causal) + bias + ReLU ----------------------------------
    h1 = jnp.zeros((Lt, cout), jnp.float32)
    for j in range(ksize):                           # static unroll over taps
        h1 = h1 + jnp.dot(xe_ref[pl.ds(j * dilation, Lt), :], w1_ref[j],
                          preferred_element_type=jnp.float32)
    h1 = jnp.maximum(h1 + b1_ref[...], 0.0)
    # dropout1: identity (eval mode)
    h1e_ref[pl.ds(pad, Lt), :] = h1.astype(h1e_ref.dtype)

    # ---- conv2 (dilated, causal) + bias + ReLU ----------------------------------
    h2 = jnp.zeros((Lt, cout), jnp.float32)
    for j in range(ksize):
        h2 = h2 + jnp.dot(h1e_ref[pl.ds(j * dilation, Lt), :], w2_ref[j],
                          preferred_element_type=jnp.float32)
    h2 = jnp.maximum(h2 + b2_ref[...], 0.0)
    # dropout2: identity (eval mode)

    # ---- residual + final ReLU (f32 VPU math, bf16 store) -----------------------
    if has_downsample:
        res = jnp.dot(x_cur, wd_ref[...], preferred_element_type=jnp.float32) + bd_ref[...]
    else:
        res = x_cur.astype(jnp.float32)
    o_ref[...] = jnp.maximum(h2 + res, 0.0).astype(o_ref.dtype)


def temporal_block_pallas(x_blc, layer, *, dilation, ksize, time_tile=512):
    """x_blc: (B, L, Cin_p) bf16 (channel-padded) -> (B, L, Cout_p) bf16."""
    B, L, cin_p = x_blc.shape
    w1, b1, w2, b2, wd, bd = layer
    cout_p = w1.shape[-1]
    pad = (ksize - 1) * dilation
    has_downsample = wd is not None

    Lt = _pick_time_tile(L, pad, time_tile)
    n_t = L // Lt
    use_carry = (pad > 0) and (n_t > 1)
    if use_carry:
        assert Lt >= pad, (Lt, pad)

    full = lambda shape: pl.BlockSpec(shape, lambda b, t: (0,) * len(shape))

    in_specs = [
        pl.BlockSpec((None, Lt, cin_p), lambda b, t: (b, t, 0)),    # current x tile
        full((ksize, cin_p, cout_p)),                               # w1
        full((1, cout_p)),                                          # b1
        full((ksize, cout_p, cout_p)),                              # w2
        full((1, cout_p)),                                          # b2
    ]
    args = [x_blc, w1, b1, w2, b2]
    if has_downsample:
        in_specs += [full((cin_p, cout_p)), full((1, cout_p))]
        args += [wd, bd]

    kernel = functools.partial(
        _temporal_block_kernel,
        Lt=Lt, pad=pad, dilation=dilation, ksize=ksize,
        has_downsample=has_downsample, use_carry=use_carry)

    flops = 2 * B * L * ksize * (cin_p * cout_p + cout_p * cout_p)
    if has_downsample:
        flops += 2 * B * L * cin_p * cout_p
    bytes_accessed = B * L * (cin_p + cout_p) * 2
    bytes_accessed += (w1.size + w2.size) * 2 + (b1.size + b2.size) * 4
    if has_downsample:
        bytes_accessed += wd.size * 2 + bd.size * 4

    out = pl.pallas_call(
        kernel,
        out_shape=jax.ShapeDtypeStruct((B, L, cout_p), jnp.bfloat16),
        grid_spec=pltpu.PrefetchScalarGridSpec(
            num_scalar_prefetch=0,
            grid=(B, n_t),
            in_specs=in_specs,
            out_specs=pl.BlockSpec((None, Lt, cout_p), lambda b, t: (b, t, 0)),
            scratch_shapes=[
                pltpu.VMEM((Lt + pad, cin_p), jnp.bfloat16),   # xe: x window + carry
                pltpu.VMEM((Lt + pad, cout_p), jnp.bfloat16),  # h1e: conv1 window + carry
            ],
        ),
        compiler_params=pltpu.CompilerParams(
            # time axis carries state across tiles -> must stay sequential ("arbitrary");
            # batch axis is independent -> "parallel" (megacore on v7x).
            dimension_semantics=("parallel", "arbitrary")),
        cost_estimate=pl.CostEstimate(flops=int(flops), transcendentals=0,
                                      bytes_accessed=int(bytes_accessed)),
    )(*args)
    return out


# --------------------------- parameter construction ---------------------------


def _weight_norm_fold(v, g):
    """Effective weight of torch.nn.utils.weight_norm (dim=0 over out-channels).

    v: (k, Cin, Cout), g: (Cout,)  ->  (k, Cin, Cout)
    """
    norm = jnp.sqrt(jnp.sum(v * v, axis=(0, 1), keepdims=True))     # (1, 1, Cout)
    return v * (g[None, None, :] / norm)


def make_tcn_params(key, num_inputs, num_channels, kernel_size):
    """Deterministic synthetic parameters mirroring the PyTorch module shapes (f32, unpadded)."""
    params = []
    in_ch = num_inputs
    for out_ch in num_channels:
        key, k1, k2, k3, k4, k5, k6, k7, k8 = jax.random.split(key, 9)
        # conv weights stored as (k, Cin, Cout)  (torch Conv1d weight is (Cout, Cin, k))
        v1 = 0.01 * jax.random.normal(k1, (kernel_size, in_ch, out_ch), jnp.float32)
        g1 = 1.0 + 0.1 * jax.random.normal(k2, (out_ch,), jnp.float32)
        b1 = 0.01 * jax.random.normal(k3, (out_ch,), jnp.float32)
        v2 = 0.01 * jax.random.normal(k4, (kernel_size, out_ch, out_ch), jnp.float32)
        g2 = 1.0 + 0.1 * jax.random.normal(k5, (out_ch,), jnp.float32)
        b2 = 0.01 * jax.random.normal(k6, (out_ch,), jnp.float32)
        w1 = _weight_norm_fold(v1, g1)
        w2 = _weight_norm_fold(v2, g2)
        if in_ch != out_ch:
            wd = 0.01 * jax.random.normal(k7, (in_ch, out_ch), jnp.float32)
            bd = 0.01 * jax.random.normal(k8, (out_ch,), jnp.float32)
        else:
            wd, bd = None, None
        params.append((w1, b1, w2, b2, wd, bd))
        in_ch = out_ch
    return params


def _prepare_layer(raw, cin_p, cout_p):
    """Zero-pad channels to lane-dense multiples of 128; bf16 matmul weights, f32 biases."""
    w1, b1, w2, b2, wd, bd = raw
    k = w1.shape[0]
    w1p = _pad_to(w1, (k, cin_p, cout_p)).astype(jnp.bfloat16)
    b1p = _pad_to(b1, (cout_p,)).reshape(1, cout_p).astype(jnp.float32)
    w2p = _pad_to(w2, (k, cout_p, cout_p)).astype(jnp.bfloat16)
    b2p = _pad_to(b2, (cout_p,)).reshape(1, cout_p).astype(jnp.float32)
    if wd is not None:
        wdp = _pad_to(wd, (cin_p, cout_p)).astype(jnp.bfloat16)
        bdp = _pad_to(bd, (cout_p,)).reshape(1, cout_p).astype(jnp.float32)
    else:
        wdp, bdp = None, None
    return w1p, b1p, w2p, b2p, wdp, bdp


# ------------------------------ full network ----------------------------------


def temporal_conv_net(x_ncl, params, kernel_size, *, time_tile=512):
    """Matches TemporalConvNet.forward: x (B, C, L) -> (B, C_last, L), f32."""
    B, c0, L = x_ncl.shape
    cin = c0
    cin_p = _round_up(max(cin, 1), LANE)
    h = jnp.transpose(x_ncl, (0, 2, 1))                     # NCL -> BLC
    h = _pad_to(h, (B, L, cin_p)).astype(jnp.bfloat16)      # lane-dense, bf16 activations
    for i, raw in enumerate(params):
        cout = raw[0].shape[-1]
        cout_p = _round_up(cout, LANE)
        layer = _prepare_layer(raw, cin_p, cout_p)
        h = temporal_block_pallas(h, layer, dilation=2 ** i, ksize=kernel_size,
                                  time_tile=time_tile)
        cin, cin_p = cout, cout_p
    out = h[..., :cin].astype(jnp.float32)                  # strip channel padding
    return jnp.transpose(out, (0, 2, 1))                    # BLC -> NCL


# ------------------------------ pure-JAX reference ----------------------------
# Mirrors the kernel's numerics (bf16 matmul inputs, f32 accumulation, bf16 activations)
# so the comparison tolerance can stay tight.


def _ref_causal_conv(x_bf16, w, b, dilation):
    B, L, _ = x_bf16.shape
    k = w.shape[0]
    pad = (k - 1) * dilation
    xp = jnp.pad(x_bf16, ((0, 0), (pad, 0), (0, 0)))
    wb = w.astype(jnp.bfloat16)
    out = jnp.broadcast_to(b[None, None, :], (B, L, w.shape[-1])).astype(jnp.float32)
    for j in range(k):
        out = out + jnp.einsum('blc,cd->bld', xp[:, j * dilation:j * dilation + L, :], wb[j],
                               preferred_element_type=jnp.float32)
    return out


def temporal_conv_net_ref(x_ncl, params, kernel_size):
    h = jnp.transpose(x_ncl, (0, 2, 1)).astype(jnp.bfloat16)
    for i, (w1, b1, w2, b2, wd, bd) in enumerate(params):
        d = 2 ** i
        o1 = jax.nn.relu(_ref_causal_conv(h, w1, b1, d))
        o2 = jax.nn.relu(_ref_causal_conv(o1.astype(jnp.bfloat16), w2, b2, d))
        if wd is None:
            res = h.astype(jnp.float32)
        else:
            res = jnp.einsum('blc,cd->bld', h, wd.astype(jnp.bfloat16),
                             preferred_element_type=jnp.float32) + bd[None, None, :]
        h = jax.nn.relu(o2 + res).astype(jnp.bfloat16)
    return jnp.transpose(h, (0, 2, 1)).astype(jnp.float32)


# ----------------------------------- main --------------------------------------


if __name__ == "__main__":
    key = jax.random.PRNGKey(0)
    kx, kp = jax.random.split(key)

    # small shapes consistent with the module: x is (batch, num_inputs, seq_len)
    B, num_inputs, L = 2, 4, 64
    num_channels = (16, 32)
    kernel_size = 2

    x = jax.random.normal(kx, (B, num_inputs, L), jnp.float32)
    params = make_tcn_params(kp, num_inputs, num_channels, kernel_size)

    # small time tile so multiple tiles + causal carry are exercised on this tiny demo
    out = jax.block_until_ready(temporal_conv_net(x, params, kernel_size, time_tile=16))
    ref = jax.block_until_ready(temporal_conv_net_ref(x, params, kernel_size))

    assert out.shape == (B, num_channels[-1], L), out.shape
    max_err = float(jnp.max(jnp.abs(out - ref)))
    assert jnp.allclose(out, ref, atol=2e-4, rtol=2e-4), f"mismatch vs reference (max_err={max_err})"

    # TODO(synk): dropout layers are identity here (eval-mode semantics); training-mode
    # stochastic dropout would use pltpu.prng_seed / pltpu.stateful_bernoulli.
    print("KERNEL_OK")
</pallas_src>

<mosaic_0001>
module attributes {stable_mosaic.version = 11 : i64} {
  func.func @_temporal_block_kernel(%arg0: i32, %arg1: i32, %arg2: memref<1x16x128xbf16, #tpu.memory_space<vmem>>, %arg3: memref<2x128x128xbf16, #tpu.memory_space<vmem>>, %arg4: memref<1x128xf32, #tpu.memory_space<vmem>>, %arg5: memref<2x128x128xbf16, #tpu.memory_space<vmem>>, %arg6: memref<1x128xf32, #tpu.memory_space<vmem>>, %arg7: memref<128x128xbf16, #tpu.memory_space<vmem>>, %arg8: memref<1x128xf32, #tpu.memory_space<vmem>>, %arg9: memref<1x16x128xbf16, #tpu.memory_space<vmem>>, %arg10: memref<17x128xbf16, #tpu.memory_space<vmem>>, %arg11: memref<17x128xbf16, #tpu.memory_space<vmem>>) attributes {dimension_semantics = [#tpu.dimension_semantics<parallel>, #tpu.dimension_semantics<arbitrary>], iteration_bounds = array<i64: 2, 4>, scalar_prefetch = 0 : i64, scratch_operands = 2 : i64, tpu.core_type = #tpu.core_type<tc>, window_params = [{transform_indices = @transform_0, window_bounds = array<i64: 1, 16, 128>}, {pipeline_mode = #tpu.pipeline_mode<synchronous>, transform_indices = @transform_1, window_bounds = array<i64: 2, 128, 128>}, {pipeline_mode = #tpu.pipeline_mode<synchronous>, transform_indices = @transform_2, window_bounds = array<i64: 1, 128>}, {pipeline_mode = #tpu.pipeline_mode<synchronous>, transform_indices = @transform_3, window_bounds = array<i64: 2, 128, 128>}, {pipeline_mode = #tpu.pipeline_mode<synchronous>, transform_indices = @transform_4, window_bounds = array<i64: 1, 128>}, {pipeline_mode = #tpu.pipeline_mode<synchronous>, transform_indices = @transform_5, window_bounds = array<i64: 128, 128>}, {pipeline_mode = #tpu.pipeline_mode<synchronous>, transform_indices = @transform_6, window_bounds = array<i64: 1, 128>}, {transform_indices = @transform_7, window_bounds = array<i64: 1, 16, 128>}]} {
    %c0_i32 = arith.constant 0 : i32
    %0 = arith.cmpi eq, %arg1, %c0_i32 : i32
    %1 = arith.extui %0 : i1 to i32
    %c0_i32_0 = arith.constant 0 : i32
    %2 = arith.cmpi ne, %1, %c0_i32_0 : i32
    scf.if %2 {
      %cst_48 = arith.constant 0.000000e+00 : bf16
      %55 = vector.broadcast %cst_48 : bf16 to vector<1x128xbf16>
      %c0_49 = arith.constant 0 : index
      %c0_50 = arith.constant 0 : index
      %56 = vector.load %arg10[%c0_49, %c0_50] : memref<17x128xbf16, #tpu.memory_space<vmem>>, vector<1x128xbf16>
      tpu.vector_store %arg10[%c0_49, %c0_50], %55 {strides = array<i32>} : memref<17x128xbf16, #tpu.memory_space<vmem>>, vector<1x128xbf16>,
      %cst_51 = arith.constant 0.000000e+00 : bf16
      %57 = vector.broadcast %cst_51 : bf16 to vector<1x128xbf16>
      %c0_52 = arith.constant 0 : index
      %c0_53 = arith.constant 0 : index
      %58 = vector.load %arg11[%c0_52, %c0_53] : memref<17x128xbf16, #tpu.memory_space<vmem>>, vector<1x128xbf16>
      tpu.vector_store %arg11[%c0_52, %c0_53], %57 {strides = array<i32>} : memref<17x128xbf16, #tpu.memory_space<vmem>>, vector<1x128xbf16>,
    } else {
    }
    %c0_i32_1 = arith.constant 0 : i32
    %3 = arith.cmpi ne, %arg1, %c0_i32_1 : i32
    %4 = arith.extui %3 : i1 to i32
    %c0_i32_2 = arith.constant 0 : i32
    %5 = arith.cmpi ne, %4, %c0_i32_2 : i32
    scf.if %5 {
      %c16 = arith.constant 16 : index
      %c0_48 = arith.constant 0 : index
      %55 = vector.load %arg10[%c16, %c0_48] : memref<17x128xbf16, #tpu.memory_space<vmem>>, vector<1x128xbf16>
      %c0_49 = arith.constant 0 : index
      %c0_50 = arith.constant 0 : index
      %56 = vector.load %arg10[%c0_49, %c0_50] : memref<17x128xbf16, #tpu.memory_space<vmem>>, vector<1x128xbf16>
      tpu.vector_store %arg10[%c0_49, %c0_50], %55 {strides = array<i32>} : memref<17x128xbf16, #tpu.memory_space<vmem>>, vector<1x128xbf16>,
      %c16_51 = arith.constant 16 : index
      %c0_52 = arith.constant 0 : index
      %57 = vector.load %arg11[%c16_51, %c0_52] : memref<17x128xbf16, #tpu.memory_space<vmem>>, vector<1x128xbf16>
      %c0_53 = arith.constant 0 : index
      %c0_54 = arith.constant 0 : index
      %58 = vector.load %arg11[%c0_53, %c0_54] : memref<17x128xbf16, #tpu.memory_space<vmem>>, vector<1x128xbf16>
      tpu.vector_store %arg11[%c0_53, %c0_54], %57 {strides = array<i32>} : memref<17x128xbf16, #tpu.memory_space<vmem>>, vector<1x128xbf16>,
    } else {
    }
    %c0 = arith.constant 0 : index
    %c0_3 = arith.constant 0 : index
    %c0_4 = arith.constant 0 : index
    %6 = vector.load %arg2[%c0, %c0_3, %c0_4] : memref<1x16x128xbf16, #tpu.memory_space<vmem>>, vector<1x16x128xbf16>
    %7 = vector.shape_cast %6 : vector<1x16x128xbf16> to vector<16x128xbf16>
    %c1 = arith.constant 1 : index
    %c0_5 = arith.constant 0 : index
    %8 = vector.load %arg10[%c1, %c0_5] : memref<17x128xbf16, #tpu.memory_space<vmem>>, vector<16x128xbf16>
    tpu.vector_store %arg10[%c1, %c0_5], %7 {strides = array<i32>} : memref<17x128xbf16, #tpu.memory_space<vmem>>, vector<16x128xbf16>,
    %cst = arith.constant 0.000000e+00 : f32
    %9 = vector.broadcast %cst : f32 to vector<16x128xf32>
    %c0_6 = arith.constant 0 : index
    %c0_7 = arith.constant 0 : index
    %10 = vector.load %arg10[%c0_6, %c0_7] : memref<17x128xbf16, #tpu.memory_space<vmem>>, vector<16x128xbf16>
    %c0_8 = arith.constant 0 : index
    %c0_9 = arith.constant 0 : index
    %c0_10 = arith.constant 0 : index
    %11 = vector.load %arg3[%c0_8, %c0_9, %c0_10] : memref<2x128x128xbf16, #tpu.memory_space<vmem>>, vector<1x128x128xbf16>
    %12 = vector.shape_cast %11 : vector<1x128x128xbf16> to vector<128x128xbf16>
    %cst_11 = arith.constant dense<0.000000e+00> : vector<16x128xf32>
    %13 = tpu.matmul %10, %12, %cst_11 {dimension_numbers = #tpu.dot_dimension_numbers<[1], [0], [0], [1], [0, 0, 1, 1], [], []>} : vector<16x128xbf16>, vector<128x128xbf16>, vector<16x128xf32> -> vector<16x128xf32>
    %14 = arith.addf %9, %13 : vector<16x128xf32>
    %c1_12 = arith.constant 1 : index
    %c0_13 = arith.constant 0 : index
    %15 = vector.load %arg10[%c1_12, %c0_13] : memref<17x128xbf16, #tpu.memory_space<vmem>>, vector<16x128xbf16>
    %c1_14 = arith.constant 1 : index
    %c0_15 = arith.constant 0 : index
    %c0_16 = arith.constant 0 : index
    %16 = vector.load %arg3[%c1_14, %c0_15, %c0_16] : memref<2x128x128xbf16, #tpu.memory_space<vmem>>, vector<1x128x128xbf16>
    %17 = vector.shape_cast %16 : vector<1x128x128xbf16> to vector<128x128xbf16>
    %cst_17 = arith.constant dense<0.000000e+00> : vector<16x128xf32>
    %18 = tpu.matmul %15, %17, %cst_17 {dimension_numbers = #tpu.dot_dimension_numbers<[1], [0], [0], [1], [0, 0, 1, 1], [], []>} : vector<16x128xbf16>, vector<128x128xbf16>, vector<16x128xf32> -> vector<16x128xf32>
    %19 = arith.addf %14, %18 : vector<16x128xf32>
    %c0_18 = arith.constant 0 : index
    %c0_19 = arith.constant 0 : index
    %20 = vector.load %arg4[%c0_18, %c0_19] : memref<1x128xf32, #tpu.memory_space<vmem>>, vector<1x128xf32>
    %21 = vector.broadcast %20 : vector<1x128xf32> to vector<16x128xf32>
    %22 = arith.addf %19, %21 : vector<16x128xf32>
    %cst_20 = arith.constant 0.000000e+00 : f32
    %23 = vector.broadcast %cst_20 : f32 to vector<16x128xf32>
    %24 = arith.maximumf %22, %23 : vector<16x128xf32>
    %25 = arith.truncf %24 : vector<16x128xf32> to vector<16x128xbf16>
    %c1_21 = arith.constant 1 : index
    %c0_22 = arith.constant 0 : index
    %26 = vector.load %arg11[%c1_21, %c0_22] : memref<17x128xbf16, #tpu.memory_space<vmem>>, vector<16x128xbf16>
    tpu.vector_store %arg11[%c1_21, %c0_22], %25 {strides = array<i32>} : memref<17x128xbf16, #tpu.memory_space<vmem>>, vector<16x128xbf16>,
    %cst_23 = arith.constant 0.000000e+00 : f32
    %27 = vector.broadcast %cst_23 : f32 to vector<16x128xf32>
    %c0_24 = arith.constant 0 : index
    %c0_25 = arith.constant 0 : index
    %28 = vector.load %arg11[%c0_24, %c0_25] : memref<17x128xbf16, #tpu.memory_space<vmem>>, vector<16x128xbf16>
    %c0_26 = arith.constant 0 : index
    %c0_27 = arith.constant 0 : index
    %c0_28 = arith.constant 0 : index
    %29 = vector.load %arg5[%c0_26, %c0_27, %c0_28] : memref<2x128x128xbf16, #tpu.memory_space<vmem>>, vector<1x128x128xbf16>
    %30 = vector.shape_cast %29 : vector<1x128x128xbf16> to vector<128x128xbf16>
    %cst_29 = arith.constant dense<0.000000e+00> : vector<16x128xf32>
    %31 = tpu.matmul %28, %30, %cst_29 {dimension_numbers = #tpu.dot_dimension_numbers<[1], [0], [0], [1], [0, 0, 1, 1], [], []>} : vector<16x128xbf16>, vector<128x128xbf16>, vector<16x128xf32> -> vector<16x128xf32>
    %32 = arith.addf %27, %31 : vector<16x128xf32>
    %c1_30 = arith.constant 1 : index
    %c0_31 = arith.constant 0 : index
    %33 = vector.load %arg11[%c1_30, %c0_31] : memref<17x128xbf16, #tpu.memory_space<vmem>>, vector<16x128xbf16>
    %c1_32 = arith.constant 1 : index
    %c0_33 = arith.constant 0 : index
    %c0_34 = arith.constant 0 : index
    %34 = vector.load %arg5[%c1_32, %c0_33, %c0_34] : memref<2x128x128xbf16, #tpu.memory_space<vmem>>, vector<1x128x128xbf16>
    %35 = vector.shape_cast %34 : vector<1x128x128xbf16> to vector<128x128xbf16>
    %cst_35 = arith.constant dense<0.000000e+00> : vector<16x128xf32>
    %36 = tpu.matmul %33, %35, %cst_35 {dimension_numbers = #tpu.dot_dimension_numbers<[1], [0], [0], [1], [0, 0, 1, 1], [], []>} : vector<16x128xbf16>, vector<128x128xbf16>, vector<16x128xf32> -> vector<16x128xf32>
    %37 = arith.addf %32, %36 : vector<16x128xf32>
    %c0_36 = arith.constant 0 : index
    %c0_37 = arith.constant 0 : index
    %38 = vector.load %arg6[%c0_36, %c0_37] : memref<1x128xf32, #tpu.memory_space<vmem>>, vector<1x128xf32>
    %39 = vector.broadcast %38 : vector<1x128xf32> to vector<16x128xf32>
    %40 = arith.addf %37, %39 : vector<16x128xf32>
    %cst_38 = arith.constant 0.000000e+00 : f32
    %41 = vector.broadcast %cst_38 : f32 to vector<16x128xf32>
    %42 = arith.maximumf %40, %41 : vector<16x128xf32>
    %c0_39 = arith.constant 0 : index
    %c0_40 = arith.constant 0 : index
    %43 = vector.load %arg7[%c0_39, %c0_40] : memref<128x128xbf16, #tpu.memory_space<vmem>>, vector<128x128xbf16>
    %cst_41 = arith.constant dense<0.000000e+00> : vector<16x128xf32>
    %44 = tpu.matmul %7, %43, %cst_41 {dimension_numbers = #tpu.dot_dimension_numbers<[1], [0], [0], [1], [0, 0, 1, 1], [], []>} : vector<16x128xbf16>, vector<128x128xbf16>, vector<16x128xf32> -> vector<16x128xf32>
    %c0_42 = arith.constant 0 : index
    %c0_43 = arith.constant 0 : index
    %45 = vector.load %arg8[%c0_42, %c0_43] : memref<1x128xf32, #tpu.memory_space<vmem>>, vector<1x128xf32>
    %46 = vector.broadcast %45 : vector<1x128xf32> to vector<16x128xf32>
    %47 = arith.addf %44, %46 : vector<16x128xf32>
    %48 = arith.addf %42, %47 : vector<16x128xf32>
    %cst_44 = arith.constant 0.000000e+00 : f32
    %49 = vector.broadcast %cst_44 : f32 to vector<16x128xf32>
    %50 = arith.maximumf %48, %49 : vector<16x128xf32>
    %51 = arith.truncf %50 : vector<16x128xf32> to vector<16x128xbf16>
    %c0_45 = arith.constant 0 : index
    %c0_46 = arith.constant 0 : index
    %c0_47 = arith.constant 0 : index
    %52 = vector.load %arg9[%c0_45, %c0_46, %c0_47] : memref<1x16x128xbf16, #tpu.memory_space<vmem>>, vector<1x16x128xbf16>
    %53 = vector.shape_cast %52 : vector<1x16x128xbf16> to vector<16x128xbf16>
    %54 = vector.shape_cast %51 : vector<16x128xbf16> to vector<1x16x128xbf16>
    tpu.vector_store %arg9[%c0_45, %c0_46, %c0_47], %54 {strides = array<i32>} : memref<1x16x128xbf16, #tpu.memory_space<vmem>>, vector<1x16x128xbf16>,
    return
  }
  func.func @transform_0(%arg0: i32, %arg1: i32) -> (i32, i32, i32) {
    %c0_i32 = arith.constant 0 : i32
    %c0_i32_0 = arith.constant 0 : i32
    return %arg0, %arg1, %c0_i32 : i32, i32, i32
  }
  func.func @transform_1(%arg0: i32, %arg1: i32) -> (i32, i32, i32) {
    %c0_i32 = arith.constant 0 : i32
    %c0_i32_0 = arith.constant 0 : i32
    %c0_i32_1 = arith.constant 0 : i32
    %c0_i32_2 = arith.constant 0 : i32
    return %c0_i32, %c0_i32_0, %c0_i32_1 : i32, i32, i32
  }
  func.func @transform_2(%arg0: i32, %arg1: i32) -> (i32, i32) {
    %c0_i32 = arith.constant 0 : i32
    %c0_i32_0 = arith.constant 0 : i32
    %c0_i32_1 = arith.constant 0 : i32
    return %c0_i32, %c0_i32_0 : i32, i32
  }
  func.func @transform_3(%arg0: i32, %arg1: i32) -> (i32, i32, i32) {
    %c0_i32 = arith.constant 0 : i32
    %c0_i32_0 = arith.constant 0 : i32
    %c0_i32_1 = arith.constant 0 : i32
    %c0_i32_2 = arith.constant 0 : i32
    return %c0_i32, %c0_i32_0, %c0_i32_1 : i32, i32, i32
  }
  func.func @transform_4(%arg0: i32, %arg1: i32) -> (i32, i32) {
    %c0_i32 = arith.constant 0 : i32
    %c0_i32_0 = arith.constant 0 : i32
    %c0_i32_1 = arith.constant 0 : i32
    return %c0_i32, %c0_i32_0 : i32, i32
  }
  func.func @transform_5(%arg0: i32, %arg1: i32) -> (i32, i32) {
    %c0_i32 = arith.constant 0 : i32
    %c0_i32_0 = arith.constant 0 : i32
    %c0_i32_1 = arith.constant 0 : i32
    return %c0_i32, %c0_i32_0 : i32, i32
  }
  func.func @transform_6(%arg0: i32, %arg1: i32) -> (i32, i32) {
    %c0_i32 = arith.constant 0 : i32
    %c0_i32_0 = arith.constant 0 : i32
    %c0_i32_1 = arith.constant 0 : i32
    return %c0_i32, %c0_i32_0 : i32, i32
  }
  func.func @transform_7(%arg0: i32, %arg1: i32) -> (i32, i32, i32) {
    %c0_i32 = arith.constant 0 : i32
    %c0_i32_0 = arith.constant 0 : i32
    return %arg0, %arg1, %c0_i32 : i32, i32, i32
  }
}

</mosaic_0001>

<llo_original>
// kernel: tpu_custom_call.1
$region0: #{tpu_custom_call.1}
  #allocation0 [shape = 'u32[]', space=smem, size = 0x4, offset = 0x4, fixed_abs, tag = 'smem constant byte address 0x4 - core index']
  #allocation1 [shape = 'u32[144,128]{1,0:T(1,128)}', space=vmem, size = 0x12000, scoped, tag = 'internal scratch']
  #allocation2 [shape = 'bf16[17,128]{1,0:T(8,128)(2,1)}', space=vmem, size = 0x1800, scoped, tag = 'scratch operand']
  #allocation3 [shape = 'bf16[17,128]{1,0:T(8,128)(2,1)}', space=vmem, size = 0x1800, scoped, tag = 'scratch operand']
  %s0 = inlined_call_operand.hbm [shape: bf16[2,64,128], index: 0, kind: input, shape index: {}]
  %s1 = inlined_call_operand.hbm [shape: bf16[2,128,128], index: 1, kind: input, shape index: {}]
  %s2 = inlined_call_operand.vmem [shape: f32[1,128], index: 2, kind: input, shape index: {}]
  %s3 = inlined_call_operand.hbm [shape: bf16[2,128,128], index: 3, kind: input, shape index: {}]
  %s4 = inlined_call_operand.vmem [shape: f32[1,128], index: 4, kind: input, shape index: {}]
  %s5 = inlined_call_operand.hbm [shape: bf16[128,128], index: 5, kind: input, shape index: {}]
  %s6 = inlined_call_operand.vmem [shape: f32[1,128], index: 6, kind: input, shape index: {}]
  %s7 = inlined_call_operand.hbm [shape: bf16[2,64,128], index: 7, kind: output, shape index: {}]
  %s8 = sld [smem:[#allocation0]]
  $region85: #{tpu_custom_call.1} parent=0
    _
  %s10 = ssub.s32 1, %s8
  %s11 = scalar_select 0, %s10, %s8
  $region1: #{tpu_custom_call.1} parent=0
    #allocation4 [shape = 'u8[8192]{0}', space=vmem, size = 0x2000, scoped, tag = 'input window, operand 0']
    #allocation5 [shape = 's32[2]{0}', space=sflag, size = 0x8, scoped, tag = 'scoped memory for tpu_custom_call.1']
    #allocation6 [shape = 's32[2]{0}', space=sflag, size = 0x8, scoped, tag = 'scoped memory for tpu_custom_call.1']
    #allocation7 [shape = 'u8[65536]{0}', space=vmem, size = 0x10000, scoped, tag = 'input window, operand 1, single buffered']
    #allocation8 [shape = 's32[1]{0}', space=sflag, size = 0x4, scoped, tag = 'scoped memory for tpu_custom_call.1']
    #allocation9 [shape = 'u8[65536]{0}', space=vmem, size = 0x10000, scoped, tag = 'input window, operand 3, single buffered']
    #allocation10 [shape = 'u8[32768]{0}', space=vmem, size = 0x8000, scoped, tag = 'input window, operand 5, single buffered']
    #allocation11 [shape = 's32[1]{0}', space=sflag, size = 0x4, scoped, tag = 'scoped memory for tpu_custom_call.1']
    #allocation12 [shape = 'u8[8192]{0}', space=vmem, size = 0x2000, scoped, tag = 'output window, operand 0']
    %12 = vsyncpa [#allocation5], 0
    %s13 = scalar_lea.sflag [#allocation5], 1
    %14 = vsyncpa %s13, 0
    %15 = vsyncpa [#allocation8], 0
    %16 = vsyncpa [#allocation11], 0
    %17 = vsyncpa [#allocation6], 0
    %s18 = scalar_lea.sflag [#allocation6], 1
    %19 = vsyncpa %s18, 0
    loop: start=0, step=1, limit=10
    $region2: #{tpu_custom_call.1} parent=1 // loop_pre_header
      _
    $region3: #{tpu_custom_call.1} parent=1 // loop_header
      %s21 = sphi 0, %s25
      %p22 = scmp.ge.s32.totalorder %s21, 10
      %s28 = sphi 0, %s40
      %s29 = sphi 0, %s36
      %s30 = sphi 0, %s28
      %s31 = sphi 0, %s29
      %s32 = sphi 0, %s30
      %s33 = sphi 0, %s31
      %s45 = sphi 0, %s47
      %s48 = sphi 0, %s45
      %s49 = sphi 0, %s48
      %s65 = sphi 0, %s49
      %s69 = sphi 0, %s69
      %s71 = sphi 0, %s69
      %s72 = sphi 0, %s71
      %s86 = sphi 0, %s72
      %s90 = sphi 0, %s90
      %s92 = sphi 0, %s90
      %s93 = sphi 0, %s92
      %s107 = sphi 0, %s93
      %s111 = sphi 0, %s111
      %s113 = sphi 0, %s111
      %s114 = sphi 0, %s113
      %s128 = sphi 0, %s114
      %s132 = sphi 0, %s132
      %s134 = sphi 0, %s132
      %s135 = sphi 0, %s134
      %s149 = sphi 0, %s135
      %s153 = sphi 0, %s153
      %s155 = sphi 0, %s153
      %s156 = sphi 0, %s155
      %s170 = sphi 0, %s156
      %s174 = sphi 0, %s174
      %s176 = sphi 0, %s174
      %s177 = sphi 0, %s176
      %s191 = sphi 0, %s177
      %s199 = sphi 0, %s201
      %s202 = sphi 0, %s199
      %s203 = sphi 0, %s202
      %s219 = sphi 0, %s203
    $region4: #{tpu_custom_call.1} parent=1 // loop_header_branch
      %24 = sbr.rel (%p22) target = $region8
    $region5: #{tpu_custom_call.1} parent=1 // loop_body
      %s26 = ssub.s32 %s21, 1
      %s27 = ssub.s32 %s21, 2
      %s34 = sadd.s32 1, %s29
      %p35 = scmp.ge.s32.totalorder %s34, 4
      %s36 = scalar_select %p35, 0, %s34
      %s37 = sadd.s32 1, %s28
      %s38 = scalar_select %p35, %s37, %s28
      %p39 = scmp.ge.s32.totalorder %s38, 2
      %s40 = scalar_select %p39, 0, %s38
      %s41 = ssub.s32 %s28, %s40
      %s42 = ssub.s32 %s29, %s36
      %s43 = sor.u32 %s41, %s42
      %p44 = scmp.eq.s32.totalorder %s43, 0
      %s46 = sadd.s32 %s45, 1
      %s47 = scalar_select %p44, %s45, %s46
      %p50 = pneg %p44
      %p51 = scmp.eq.s32.totalorder %s21, 7
      %p52 = por %p50, %p51
      %p53 = scmp.ne.s32.totalorder %s45, %s48
      %p54 = scmp.eq.s32.totalorder %s21, 0
      %p55 = por %p53, %p54
      %p56 = scmp.ne.s32.totalorder %s45, %s48
      %p57 = scmp.eq.s32.totalorder %s26, 7
      %p58 = por %p56, %p57
      %p59 = scmp.ne.s32.totalorder %s48, %s49
      %p60 = scmp.eq.s32.totalorder %s26, 0
      %p61 = por %p59, %p60
      %p62 = scmp.ne.s32.totalorder %s48, %s49
      %p63 = scmp.eq.s32.totalorder %s27, 7
      %p64 = por %p62, %p63
      %p66 = scmp.ne.s32.totalorder %s49, %s65
      %p67 = scmp.eq.s32.totalorder %s27, 0
      %p68 = por %p66, %p67
      %s70 = sadd.s32 %s69, 1
      %p73 = scmp.eq.s32.totalorder %s21, 7
      %p74 = scmp.ne.s32.totalorder %s69, %s71
      %p75 = scmp.eq.s32.totalorder %s21, 0
      %p76 = por %p74, %p75
      %p77 = scmp.ne.s32.totalorder %s69, %s71
      %p78 = scmp.eq.s32.totalorder %s26, 7
      %p79 = por %p77, %p78
      %p80 = scmp.ne.s32.totalorder %s71, %s72
      %p81 = scmp.eq.s32.totalorder %s26, 0
      %p82 = por %p80, %p81
      %p83 = scmp.ne.s32.totalorder %s71, %s72
      %p84 = scmp.eq.s32.totalorder %s27, 7
      %p85 = por %p83, %p84
      %p87 = scmp.ne.s32.totalorder %s72, %s86
      %p88 = scmp.eq.s32.totalorder %s27, 0
      %p89 = por %p87, %p88
      %s91 = sadd.s32 %s90, 1
      %p94 = scmp.eq.s32.totalorder %s21, 7
      %p95 = scmp.ne.s32.totalorder %s90, %s92
      %p96 = scmp.eq.s32.totalorder %s21, 0
      %p97 = por %p95, %p96
      %p98 = scmp.ne.s32.totalorder %s90, %s92
      %p99 = scmp.eq.s32.totalorder %s26, 7
      %p100 = por %p98, %p99
      %p101 = scmp.ne.s32.totalorder %s92, %s93
      %p102 = scmp.eq.s32.totalorder %s26, 0
      %p103 = por %p101, %p102
      %p104 = scmp.ne.s32.totalorder %s92, %s93
      %p105 = scmp.eq.s32.totalorder %s27, 7
      %p106 = por %p104, %p105
      %p108 = scmp.ne.s32.totalorder %s93, %s107
      %p109 = scmp.eq.s32.totalorder %s27, 0
      %p110 = por %p108, %p109
      %s112 = sadd.s32 %s111, 1
      %p115 = scmp.eq.s32.totalorder %s21, 7
      %p116 = scmp.ne.s32.totalorder %s111, %s113
      %p117 = scmp.eq.s32.totalorder %s21, 0
      %p118 = por %p116, %p117
      %p119 = scmp.ne.s32.totalorder %s111, %s113
      %p120 = scmp.eq.s32.totalorder %s26, 7
      %p121 = por %p119, %p120
      %p122 = scmp.ne.s32.totalorder %s113, %s114
      %p123 = scmp.eq.s32.totalorder %s26, 0
      %p124 = por %p122, %p123
      %p125 = scmp.ne.s32.totalorder %s113, %s114
      %p126 = scmp.eq.s32.totalorder %s27, 7
      %p127 = por %p125, %p126
      %p129 = scmp.ne.s32.totalorder %s114, %s128
      %p130 = scmp.eq.s32.totalorder %s27, 0
      %p131 = por %p129, %p130
      %s133 = sadd.s32 %s132, 1
      %p136 = scmp.eq.s32.totalorder %s21, 7
      %p137 = scmp.ne.s32.totalorder %s132, %s134
      %p138 = scmp.eq.s32.totalorder %s21, 0
      %p139 = por %p137, %p138
      %p140 = scmp.ne.s32.totalorder %s132, %s134
      %p141 = scmp.eq.s32.totalorder %s26, 7
      %p142 = por %p140, %p141
      %p143 = scmp.ne.s32.totalorder %s134, %s135
      %p144 = scmp.eq.s32.totalorder %s26, 0
      %p145 = por %p143, %p144
      %p146 = scmp.ne.s32.totalorder %s134, %s135
      %p147 = scmp.eq.s32.totalorder %s27, 7
      %p148 = por %p146, %p147
      %p150 = scmp.ne.s32.totalorder %s135, %s149
      %p151 = scmp.eq.s32.totalorder %s27, 0
      %p152 = por %p150, %p151
      %s154 = sadd.s32 %s153, 1
      %p157 = scmp.eq.s32.totalorder %s21, 7
      %p158 = scmp.ne.s32.totalorder %s153, %s155
      %p159 = scmp.eq.s32.totalorder %s21, 0
      %p160 = por %p158, %p159
      %p161 = scmp.ne.s32.totalorder %s153, %s155
      %p162 = scmp.eq.s32.totalorder %s26, 7
      %p163 = por %p161, %p162
      %p164 = scmp.ne.s32.totalorder %s155, %s156
      %p165 = scmp.eq.s32.totalorder %s26, 0
      %p166 = por %p164, %p165
      %p167 = scmp.ne.s32.totalorder %s155, %s156
      %p168 = scmp.eq.s32.totalorder %s27, 7
      %p169 = por %p167, %p168
      %p171 = scmp.ne.s32.totalorder %s156, %s170
      %p172 = scmp.eq.s32.totalorder %s27, 0
      %p173 = por %p171, %p172
      %s175 = sadd.s32 %s174, 1
      %p178 = scmp.eq.s32.totalorder %s21, 7
      %p179 = scmp.ne.s32.totalorder %s174, %s176
      %p180 = scmp.eq.s32.totalorder %s21, 0
      %p181 = por %p179, %p180
      %p182 = scmp.ne.s32.totalorder %s174, %s176
      %p183 = scmp.eq.s32.totalorder %s26, 7
      %p184 = por %p182, %p183
      %p185 = scmp.ne.s32.totalorder %s176, %s177
      %p186 = scmp.eq.s32.totalorder %s26, 0
      %p187 = por %p185, %p186
      %p188 = scmp.ne.s32.totalorder %s176, %s177
      %p189 = scmp.eq.s32.totalorder %s27, 7
      %p190 = por %p188, %p189
      %p192 = scmp.ne.s32.totalorder %s177, %s191
      %p193 = scmp.eq.s32.totalorder %s27, 0
      %p194 = por %p192, %p193
      %s195 = ssub.s32 %s28, %s40
      %s196 = ssub.s32 %s29, %s36
      %s197 = sor.u32 %s195, %s196
      %p198 = scmp.eq.s32.totalorder %s197, 0
      %s200 = sadd.s32 %s199, 1
      %s201 = scalar_select %p198, %s199, %s200
      %p204 = pneg %p198
      %p205 = scmp.eq.s32.totalorder %s21, 7
      %p206 = por %p204, %p205
      %p207 = scmp.ne.s32.totalorder %s199, %s202
      %p208 = scmp.eq.s32.totalorder %s21, 0
      %p209 = por %p207, %p208
      %p210 = scmp.ne.s32.totalorder %s199, %s202
      %p211 = scmp.eq.s32.totalorder %s26, 7
      %p212 = por %p210, %p211
      %p213 = scmp.ne.s32.totalorder %s202, %s203
      %p214 = scmp.eq.s32.totalorder %s26, 0
      %p215 = por %p213, %p214
      %p216 = scmp.ne.s32.totalorder %s202, %s203
      %p217 = scmp.eq.s32.totalorder %s27, 7
      %p218 = por %p216, %p217
      %p220 = scmp.ne.s32.totalorder %s203, %s219
      %p221 = scmp.eq.s32.totalorder %s27, 0
      %p222 = por %p220, %p221
      %p223 = scmp.le.s32.totalorder 1, %s21
      %p224 = scmp.lt.s32.totalorder %s21, 9
      %p225 = pnand %p223, %p224
      %p226 = pneg %p225
      // Predicated region
      $region9: #{tpu_custom_call.1} parent=5 // pred_check
        _
      $region10: #{tpu_custom_call.1} parent=5 // pred_check_branch
        %228 = sbr.rel (%p225) target = $region12
      $region11: #{tpu_custom_call.1} parent=5 // pred_region
        %s229 = ssub.s32 %s21, 1
        // Predicated region
        $region13: #{tpu_custom_call.1} parent=11 // pred_check
          %p230 = pneg %p82
        $region14: #{tpu_custom_call.1} parent=11 // pred_check_branch
          %232 = sbr.rel (%p230) target = $region16
        $region15: #{tpu_custom_call.1} parent=11 // pred_region
          %s234 = ssub.s32 2048, 2048
          %235 = vsyncadd [#allocation8], %s234
          %s236 = sshll.u32 [#allocation7], 4
          %s237 = int_to_ptr.vmem [resolvable:$true] %s236
          %242 = dma.hbm_to_vmem [thread:$0]  %s1, 2048, %s237, [#allocation8], 64, 64, 4
        $region16: #{tpu_custom_call.1} parent=11 // pred_fallthru
          _
        // Predicated region
        $region17: #{tpu_custom_call.1} parent=11 // pred_check
          %p243 = pneg %p103
        $region18: #{tpu_custom_call.1} parent=11 // pred_check_branch
          %245 = sbr.rel (%p243) target = $region20
        $region19: #{tpu_custom_call.1} parent=11 // pred_region
          _
        $region20: #{tpu_custom_call.1} parent=11 // pred_fallthru
          _
        // Predicated region
        $region21: #{tpu_custom_call.1} parent=11 // pred_check
          %p246 = pneg %p124
        $region22: #{tpu_custom_call.1} parent=11 // pred_check_branch
          %248 = sbr.rel (%p246) target = $region24
        $region23: #{tpu_custom_call.1} parent=11 // pred_region
          %s250 = ssub.s32 2048, 2048
          %251 = vsyncadd [#allocation8], %s250
          %s252 = sshll.u32 [#allocation9], 4
          %s253 = int_to_ptr.vmem [resolvable:$true] %s252
          %258 = dma.hbm_to_vmem [thread:$0]  %s3, 2048, %s253, [#allocation8], 64, 64, 4
        $region24: #{tpu_custom_call.1} parent=11 // pred_fallthru
          _
        // Predicated region
        $region25: #{tpu_custom_call.1} parent=11 // pred_check
          %p259 = pneg %p145
        $region26: #{tpu_custom_call.1} parent=11 // pred_check_branch
          %261 = sbr.rel (%p259) target = $region28
        $region27: #{tpu_custom_call.1} parent=11 // pred_region
          _
        $region28: #{tpu_custom_call.1} parent=11 // pred_fallthru
          _
        // Predicated region
        $region29: #{tpu_custom_call.1} parent=11 // pred_check
          %p262 = pneg %p166
        $region30: #{tpu_custom_call.1} parent=11 // pred_check_branch
          %264 = sbr.rel (%p262) target = $region32
        $region31: #{tpu_custom_call.1} parent=11 // pred_region
          %s266 = ssub.s32 1024, 1024
          %267 = vsyncadd [#allocation11], %s266
          %s268 = sshll.u32 [#allocation10], 4
          %s269 = int_to_ptr.vmem [resolvable:$true] %s268
          %274 = dma.hbm_to_vmem [thread:$0]  %s5, 1024, %s269, [#allocation11], 64, 64, 4
        $region32: #{tpu_custom_call.1} parent=11 // pred_fallthru
          _
        // Predicated region
        $region33: #{tpu_custom_call.1} parent=11 // pred_check
          %p275 = pneg %p187
        $region34: #{tpu_custom_call.1} parent=11 // pred_check_branch
          %277 = sbr.rel (%p275) target = $region36
        $region35: #{tpu_custom_call.1} parent=11 // pred_region
          _
        $region36: #{tpu_custom_call.1} parent=11 // pred_fallthru
          _
      $region12: #{tpu_custom_call.1} parent=5 // pred_fallthru
        _
      %p278 = scmp.lt.s32.totalorder %s21, 8
      // Predicated region
      $region37: #{tpu_custom_call.1} parent=5 // pred_check
        %p279 = pneg %p278
      $region38: #{tpu_custom_call.1} parent=5 // pred_check_branch
        %281 = sbr.rel (%p279) target = $region40
      $region39: #{tpu_custom_call.1} parent=5 // pred_region
        // Predicated region
        $region41: #{tpu_custom_call.1} parent=39 // pred_check
          %p282 = pneg %p55
        $region42: #{tpu_custom_call.1} parent=39 // pred_check_branch
          %284 = sbr.rel (%p282) target = $region44
        $region43: #{tpu_custom_call.1} parent=39 // pred_region
          %s285 = sand.u32 %s45, 1
          %s286 = scalar_lea.sflag [#allocation5], %s285
          %s287 = sand.u32 %s45, 1
          %s288 = smul.addr %s287, 8
          %s289 = scalar_lea.vmem [#allocation4], %s288
          %s290 = smul.u32 2, %s29
          %s292 = ssub.s32 128, 128
          %293 = vsyncadd %s286, %s292
          %s294 = smul.addr %s28, 8
          %s295 = sadd.s32 %s290, %s294
          %s296 = smul.addr %s295, 64
          %s297 = scalar_lea.hbm %s0, %s296
          %s298 = sshll.u32 %s289, 4
          %s299 = int_to_ptr.vmem [resolvable:$true] %s298
          %304 = dma.hbm_to_vmem [thread:$0]  %s297, 128, %s299, %s286, 64, 64, 4
        $region44: #{tpu_custom_call.1} parent=39 // pred_fallthru
          _
      $region40: #{tpu_custom_call.1} parent=5 // pred_fallthru
        _
      %p305 = scmp.le.s32.totalorder 1, %s21
      %p306 = scmp.lt.s32.totalorder %s21, 9
      %p307 = pnand %p305, %p306
      %p308 = pneg %p307
      // Predicated region
      $region45: #{tpu_custom_call.1} parent=5 // pred_check
        _
      $region46: #{tpu_custom_call.1} parent=5 // pred_check_branch
        %310 = sbr.rel (%p307) target = $region48
      $region47: #{tpu_custom_call.1} parent=5 // pred_region
        %s311 = ssub.s32 %s21, 1
        %s312 = sand.u32 %s48, 1
        %s313 = scalar_lea.sflag [#allocation5], %s312
        %s314 = sand.u32 %s48, 1
        %s315 = smul.addr %s314, 8
        %s316 = scalar_lea.vmem [#allocation4], %s315
        // Predicated region
        $region49: #{tpu_custom_call.1} parent=47 // pred_check
          %p317 = pneg %p61
        $region50: #{tpu_custom_call.1} parent=47 // pred_check_branch
          %319 = sbr.rel (%p317) target = $region52
        $region51: #{tpu_custom_call.1} parent=47 // pred_region
          %320 = dma.done %s313, 128
        $region52: #{tpu_custom_call.1} parent=47 // pred_fallthru
          _
        // Predicated region
        $region53: #{tpu_custom_call.1} parent=47 // pred_check
          %p321 = pneg %p82
        $region54: #{tpu_custom_call.1} parent=47 // pred_check_branch
          %323 = sbr.rel (%p321) target = $region56
        $region55: #{tpu_custom_call.1} parent=47 // pred_region
          %324 = dma.done [#allocation8], 2048
        $region56: #{tpu_custom_call.1} parent=47 // pred_fallthru
          _
        // Predicated region
        $region57: #{tpu_custom_call.1} parent=47 // pred_check
          %p325 = pneg %p124
        $region58: #{tpu_custom_call.1} parent=47 // pred_check_branch
          %327 = sbr.rel (%p325) target = $region60
        $region59: #{tpu_custom_call.1} parent=47 // pred_region
          %328 = dma.done [#allocation8], 2048
        $region60: #{tpu_custom_call.1} parent=47 // pred_fallthru
          _
        // Predicated region
        $region61: #{tpu_custom_call.1} parent=47 // pred_check
          %p329 = pneg %p166
        $region62: #{tpu_custom_call.1} parent=47 // pred_check_branch
          %331 = sbr.rel (%p329) target = $region64
        $region63: #{tpu_custom_call.1} parent=47 // pred_region
          %332 = dma.done [#allocation11], 1024
        $region64: #{tpu_custom_call.1} parent=47 // pred_fallthru
          _
        %s333 = sand.u32 %s48, 1
        %s334 = scalar_lea.sflag [#allocation5], %s333
        %s335 = sand.u32 %s48, 1
        %s336 = smul.addr %s335, 8
        %s337 = scalar_lea.vmem [#allocation4], %s336
        %p338 = pneg %p61
        %p339 = pneg %p58
        %p340 = pneg %p82
        %p341 = pneg %p79
        %p342 = pneg %p103
        %p343 = pneg %p100
        %p344 = pneg %p124
        %p345 = pneg %p121
        %p346 = pneg %p145
        %p347 = pneg %p142
        %p348 = pneg %p166
        %p349 = pneg %p163
        %p350 = pneg %p187
        %p351 = pneg %p184
        %p352 = pneg %p215
        %p353 = pneg %p212
        %s354 = sand.u32 %s202, 1
        %s355 = scalar_lea.sflag [#allocation6], %s354
        %s356 = sand.u32 %s202, 1
        %s357 = smul.addr %s356, 8
        %s358 = scalar_lea.vmem [#allocation12], %s357
        %s359 = smul.u32 2, %s31
        %s360 = smul.u32 2, %s31
        %p362 = scmp.eq.s32.totalorder %s31, 0
        // Predicated region
        $region65: #{tpu_custom_call.1} parent=47 // pred_check
          %p363 = pneg %p362
        $region66: #{tpu_custom_call.1} parent=47 // pred_check_branch
          %365 = sbr.rel (%p363) target = $region68
        $region67: #{tpu_custom_call.1} parent=47 // pred_region
          %vm366 = vcmask 1040384
          %vm367 = vsmask.f32 256
          %vm368 = vmand %vm366, %vm367
          %v369 = vld [vmem:[#allocation2] sm:$0x1]
          %v370 = vsel %vm368, 0, %v369
          %371 = vst [vmem:[#allocation2] sm:$0x1] %v370
          %v372 = vld [vmem:[#allocation3] sm:$0x1]
          %v373 = vsel %vm368, 0, %v372
          %374 = vst [vmem:[#allocation3] sm:$0x1] %v373
        $region68: #{tpu_custom_call.1} parent=47 // pred_fallthru
          _
        %p375 = scmp.ne.s32.totalorder %s31, 0
        // Predicated region
        $region69: #{tpu_custom_call.1} parent=47 // pred_check
          %p376 = pneg %p375
        $region70: #{tpu_custom_call.1} parent=47 // pred_check_branch
          %378 = sbr.rel (%p376) target = $region72
        $region71: #{tpu_custom_call.1} parent=47 // pred_region
          %v379 = vld [vmem:[#allocation2 + $0x8] sm:$0x1]
          %vm380 = vcmask 1040384
          %vm381 = vsmask.f32 256
          %vm382 = vmand %vm380, %vm381
          %v383 = vld [vmem:[#allocation2] sm:$0x1]
          %v384 = vsel %vm382, %v379, %v383
          %385 = vst [vmem:[#allocation2] sm:$0x1] %v384
          %v386 = vld [vmem:[#allocation3 + $0x8] sm:$0x1]
          %v387 = vld [vmem:[#allocation3] sm:$0x1]
          %v388 = vsel %vm382, %v386, %v387
          %389 = vst [vmem:[#allocation3] sm:$0x1] %v388
        $region72: #{tpu_custom_call.1} parent=47 // pred_fallthru
          _
        %v390 = vld [vmem:[%s316] sm:$0xf]
        %v391 = vld [vmem:[%s316 + $0x4] sm:$0xf]
        %vm392 = vsmask.f32 256
        %vm393 = vsmask.f32 4368
        %vm394 = vmor %vm392, %vm393
        %v396 = vshrl.u32 %v390, 16
        %v398 = vrot.slane %v396, 7
        %v399 = vshll.u32 %v390, 16
        %v401 = vor.u32 %v398, %v399
        %v402 = vrot.slane %v398, 4
        %v404 = vshrl.u32 %v391, 16
        %v406 = vrot.slane %v404, 7
        %v407 = vshll.u32 %v391, 16
        %v409 = vor.u32 %v406, %v407
        %v410 = vsel %vm394, %v402, %v409
        %v411 = vrot.slane %v406, 4
        %vm415 = vcmask 1043456
        %vm416 = vsmask.f32 7938
        %vm417 = vmand %vm415, %vm416
        %v418 = vld [vmem:[#allocation2] sm:$0xf]
        %v419 = vsel %vm417, %v401, %v418
        %420 = vst [vmem:[#allocation2] sm:$0xf] %v419
        %421 = vst [vmem:[#allocation2 + $0x4] sm:$0xf] %v410
        %vm422 = vcmask 1040384
        %vm423 = vmand %vm422, %vm392
        %v424 = vld [vmem:[#allocation2 + $0x8] sm:$0x1]
        %v425 = vsel %vm423, %v411, %v424
        %426 = vst [vmem:[#allocation2 + $0x8] sm:$0x1] %v425
        %v427 = vld [vmem:[#allocation2] sm:$0xf]
        %v428 = vld [vmem:[#allocation2 + $0x4] sm:$0xf]
        %v429 = vld [vmem:[#allocation7] sm:$0xf]
        %v430 = vld [vmem:[#allocation7 + $0x4] sm:$0xf]
        %v431 = vld [vmem:[#allocation7 + $0x8] sm:$0xf]
        %v432 = vld [vmem:[#allocation7 + $0xc] sm:$0xf]
        %v433 = vld [vmem:[#allocation7 + $0x10] sm:$0xf]
        %v434 = vld [vmem:[#allocation7 + $0x14] sm:$0xf]
        %v435 = vld [vmem:[#allocation7 + $0x18] sm:$0xf]
        %v436 = vld [vmem:[#allocation7 + $0x1c] sm:$0xf]
        %v437 = vld [vmem:[#allocation7 + $0x20] sm:$0xf]
        %v438 = vld [vmem:[#allocation7 + $0x24] sm:$0xf]
        %v439 = vld [vmem:[#allocation7 + $0x28] sm:$0xf]
        %v440 = vld [vmem:[#allocation7 + $0x2c] sm:$0xf]
        %v441 = vld [vmem:[#allocation7 + $0x30] sm:$0xf]
        %v442 = vld [vmem:[#allocation7 + $0x34] sm:$0xf]
        %v443 = vld [vmem:[#allocation7 + $0x38] sm:$0xf]
        %v444 = vld [vmem:[#allocation7 + $0x3c] sm:$0xf]
        %v445 = vld [vmem:[#allocation2 + $0x8] sm:$0x1]
        %s446 = scalar_lea.vmem [#allocation7], 64
        %v447 = vld [vmem:[%s446] sm:$0xf]
        %v448 = vld [vmem:[%s446 + $0x4] sm:$0xf]
        %v449 = vld [vmem:[%s446 + $0x8] sm:$0xf]
        %v450 = vld [vmem:[%s446 + $0xc] sm:$0xf]
        %v451 = vld [vmem:[%s446 + $0x10] sm:$0xf]
        %v452 = vld [vmem:[%s446 + $0x14] sm:$0xf]
        %v453 = vld [vmem:[%s446 + $0x18] sm:$0xf]
        %v454 = vld [vmem:[%s446 + $0x1c] sm:$0xf]
        %v455 = vld [vmem:[%s446 + $0x20] sm:$0xf]
        %v456 = vld [vmem:[%s446 + $0x24] sm:$0xf]
        %v457 = vld [vmem:[%s446 + $0x28] sm:$0xf]
        %v458 = vld [vmem:[%s446 + $0x2c] sm:$0xf]
        %v459 = vld [vmem:[%s446 + $0x30] sm:$0xf]
        %v460 = vld [vmem:[%s446 + $0x34] sm:$0xf]
        %v461 = vld [vmem:[%s446 + $0x38] sm:$0xf]
        %v462 = vld [vmem:[%s446 + $0x3c] sm:$0xf]
        %v466 = vunpack.c.l.b16 %v427
        %v467 = vunpack.c.l.b16 %v428
        %v468 = vunpack.c.l.b16 %v445
        %v469 = vpack.c.b16 %v467, %v466
        %v470 = vpack.c.b16 %v468, %v468
        %vm471 = vsmask.f32 7424
        %v473 = vshrl.u32 %v469, 16
        %v475 = vshll.u32 %v469, 16
        %v477 = vrot.slane %v475, 1
        %v478 = vor.u32 %v473, %v477
        %v480 = vshll.u32 %v470, 16
        %v482 = vrot.slane %v480, 1
        %v483 = vsel %vm471, %v478, %v482
        %v501 = vunpack.c.l.b16 %v447
        %v502 = vunpack.c.l.b16 %v448
        %v503 = vunpack.c.l.b16 %v449
        %v504 = vunpack.c.l.b16 %v450
        %v505 = vunpack.c.l.b16 %v451
        %v506 = vunpack.c.l.b16 %v452
        %v507 = vunpack.c.l.b16 %v453
        %v508 = vunpack.c.l.b16 %v454
        %v509 = vunpack.c.l.b16 %v455
        %v510 = vunpack.c.l.b16 %v456
        %v511 = vunpack.c.l.b16 %v457
        %v512 = vunpack.c.l.b16 %v458
        %v513 = vunpack.c.l.b16 %v459
        %v514 = vunpack.c.l.b16 %v460
        %v515 = vunpack.c.l.b16 %v461
        %v516 = vunpack.c.l.b16 %v462
        %v517 = vpack.c.b16 %v502, %v501
        %v518 = vpack.c.b16 %v504, %v503
        %v519 = vpack.c.b16 %v506, %v505
        %v520 = vpack.c.b16 %v508, %v507
        %v521 = vpack.c.b16 %v510, %v509
        %v522 = vpack.c.b16 %v512, %v511
        %v523 = vpack.c.b16 %v514, %v513
        %v524 = vpack.c.b16 %v516, %v515
        %533 = vmatprep.subr.bf16.mxu0 0
        %534 = vmatpush1.bf16.msra.mxu0 %v517
        %535 = vmatprep.subr.bf16.mxu0 0
        %536 = vmatpush1.bf16.msra.mxu0 %v518
        %537 = vmatprep.subr.bf16.mxu0 0
        %538 = vmatpush1.bf16.msra.mxu0 %v519
        %539 = vmatprep.subr.bf16.mxu0 0
        %540 = vmatpush1.bf16.msra.mxu0 %v520
        %541 = vmatprep.subr.bf16.mxu0 0
        %542 = vmatpush1.bf16.msra.mxu0 %v521
        %543 = vmatprep.subr.bf16.mxu0 0
        %544 = vmatpush1.bf16.msra.mxu0 %v522
        %545 = vmatprep.subr.bf16.mxu0 0
        %546 = vmatpush1.bf16.msra.mxu0 %v523
        %547 = vmatprep.subr.bf16.mxu0 0
        %548 = vmatpush1.bf16.msra.mxu0 %v524
        %549 = vmatprep.subr.bf16.mxu0 0
        %550 = vmatpush1.bf16.msra.mxu0 0
        %551 = vmatprep.subr.bf16.mxu0 0
        %552 = vmatpush1.bf16.msra.mxu0 0
        %553 = vmatprep.subr.bf16.mxu0 0
        %554 = vmatpush1.bf16.msra.mxu0 0
        %555 = vmatprep.subr.bf16.mxu0 0
        %556 = vmatpush1.bf16.msra.mxu0 0
        %557 = vmatprep.subr.bf16.mxu0 0
        %558 = vmatpush1.bf16.msra.mxu0 0
        %559 = vmatprep.subr.bf16.mxu0 0
        %560 = vmatpush1.bf16.msra.mxu0 0
        %561 = vmatprep.subr.bf16.mxu0 0
        %562 = vmatpush1.bf16.msra.mxu0 0
        %563 = vmatprep.subr.bf16.mxu0 0
        %564 = vmatpush1.bf16.msra.mxu0 0
        %565 = vmatprep.mubr.bf16.mxu0 0
        %566 = vmatmul.mubr.bf16.gmra.mrb[0].mxu0 %v483
        %v567 = vpop.f32.mrb[0].mxu0
        %v568 = vadd.f32 0.0, %v567
        %v569 = vpop.f32.mrb[0].mxu0
        %v570 = vpop.f32.mrb[0].mxu0
        %v571 = vadd.f32 0.0, %v570
        %v572 = vpop.f32.mrb[0].mxu0
        %573 = vdwg.mxu0
        %v591 = vunpack.c.l.b16 %v429
        %v592 = vunpack.c.l.b16 %v430
        %v593 = vunpack.c.l.b16 %v431
        %v594 = vunpack.c.l.b16 %v432
        %v595 = vunpack.c.l.b16 %v433
        %v596 = vunpack.c.l.b16 %v434
        %v597 = vunpack.c.l.b16 %v435
        %v598 = vunpack.c.l.b16 %v436
        %v599 = vunpack.c.l.b16 %v437
        %v600 = vunpack.c.l.b16 %v438
        %v601 = vunpack.c.l.b16 %v439
        %v602 = vunpack.c.l.b16 %v440
        %v603 = vunpack.c.l.b16 %v441
        %v604 = vunpack.c.l.b16 %v442
        %v605 = vunpack.c.l.b16 %v443
        %v606 = vunpack.c.l.b16 %v444
        %v607 = vpack.c.b16 %v592, %v591
        %v608 = vpack.c.b16 %v594, %v593
        %v609 = vpack.c.b16 %v596, %v595
        %v610 = vpack.c.b16 %v598, %v597
        %v611 = vpack.c.b16 %v600, %v599
        %v612 = vpack.c.b16 %v602, %v601
        %v613 = vpack.c.b16 %v604, %v603
        %v614 = vpack.c.b16 %v606, %v605
        %623 = vmatprep.subr.bf16.mxu0 0
        %624 = vmatpush1.bf16.msra.mxu0 %v607
        %625 = vmatprep.subr.bf16.mxu0 0
        %626 = vmatpush1.bf16.msra.mxu0 %v608
        %627 = vmatprep.subr.bf16.mxu0 0
        %628 = vmatpush1.bf16.msra.mxu0 %v609
        %629 = vmatprep.subr.bf16.mxu0 0
        %630 = vmatpush1.bf16.msra.mxu0 %v610
        %631 = vmatprep.subr.bf16.mxu0 0
        %632 = vmatpush1.bf16.msra.mxu0 %v611
        %633 = vmatprep.subr.bf16.mxu0 0
        %634 = vmatpush1.bf16.msra.mxu0 %v612
        %635 = vmatprep.subr.bf16.mxu0 0
        %636 = vmatpush1.bf16.msra.mxu0 %v613
        %637 = vmatprep.subr.bf16.mxu0 0
        %638 = vmatpush1.bf16.msra.mxu0 %v614
        %639 = vmatprep.subr.bf16.mxu0 0
        %640 = vmatpush1.bf16.msra.mxu0 0
        %641 = vmatprep.subr.bf16.mxu0 0
        %642 = vmatpush1.bf16.msra.mxu0 0
        %643 = vmatprep.subr.bf16.mxu0 0
        %644 = vmatpush1.bf16.msra.mxu0 0
        %645 = vmatprep.subr.bf16.mxu0 0
        %646 = vmatpush1.bf16.msra.mxu0 0
        %647 = vmatprep.subr.bf16.mxu0 0
        %648 = vmatpush1.bf16.msra.mxu0 0
        %649 = vmatprep.subr.bf16.mxu0 0
        %650 = vmatpush1.bf16.msra.mxu0 0
        %651 = vmatprep.subr.bf16.mxu0 0
        %652 = vmatpush1.bf16.msra.mxu0 0
        %653 = vmatprep.subr.bf16.mxu0 0
        %654 = vmatpush1.bf16.msra.mxu0 0
        %655 = vmatprep.mubr.bf16.mxu0 0
        %656 = vmatmul.mubr.bf16.gmra.mrb[0].mxu0 %v469
        %v657 = vpop.f32.mrb[0].mxu0
        %v658 = vadd.f32 %v568, %v657
        %v659 = vpop.f32.mrb[0].mxu0
        %v660 = vpop.f32.mrb[0].mxu0
        %v661 = vadd.f32 %v571, %v660
        %v662 = vpop.f32.mrb[0].mxu0
        %663 = vdwg.mxu0
        %v664 = vld [vmem:[%s2] sm:$0x1]
        %v666 = vlaneseq
        %v667 = vshrl.u32 %v666, 7
        %v668 = vsub.s32 0, %v667
        %v669 = vrot.slane %v664, %v668
        %v671 = vadd.f32 %v658, %v669
        %v672 = vadd.f32 %v661, %v669
        %v673 = vmax.f32 %v671, 0.0
        %v674 = vmax.f32 %v672, 0.0
        %v675 = vpack.c.bf16 %v674, %v673
        %v677 = vunpack.c.l.b16 %v675
        %v678 = vunpack.c.h.b16 %v675
        %v679 = vpack.c.b16 %v677, %v677
        %v680 = vpack.c.b16 %v678, %v678
        %v682 = vshrl.u32 %v679, 16
        %v684 = vrot.slane %v682, 7
        %v685 = vshll.u32 %v679, 16
        %v687 = vor.u32 %v684, %v685
        %v688 = vrot.slane %v684, 4
        %v690 = vshrl.u32 %v680, 16
        %v692 = vrot.slane %v690, 7
        %v693 = vshll.u32 %v680, 16
        %v695 = vor.u32 %v692, %v693
        %v696 = vsel %vm394, %v688, %v695
        %v697 = vrot.slane %v692, 4
        %v701 = vld [vmem:[#allocation3] sm:$0xf]
        %v702 = vsel %vm417, %v687, %v701
        %703 = vst [vmem:[#allocation3] sm:$0xf] %v702
        %704 = vst [vmem:[#allocation3 + $0x4] sm:$0xf] %v696
        %v705 = vld [vmem:[#allocation3 + $0x8] sm:$0x1]
        %v706 = vsel %vm423, %v697, %v705
        %707 = vst [vmem:[#allocation3 + $0x8] sm:$0x1] %v706
        %v708 = vld [vmem:[#allocation3] sm:$0xf]
        %v709 = vld [vmem:[#allocation3 + $0x4] sm:$0xf]
        %v710 = vld [vmem:[#allocation9] sm:$0xf]
        %v711 = vld [vmem:[#allocation9 + $0x4] sm:$0xf]
        %v712 = vld [vmem:[#allocation9 + $0x8] sm:$0xf]
        %v713 = vld [vmem:[#allocation9 + $0xc] sm:$0xf]
        %v714 = vld [vmem:[#allocation9 + $0x10] sm:$0xf]
        %v715 = vld [vmem:[#allocation9 + $0x14] sm:$0xf]
        %v716 = vld [vmem:[#allocation9 + $0x18] sm:$0xf]
        %v717 = vld [vmem:[#allocation9 + $0x1c] sm:$0xf]
        %v718 = vld [vmem:[#allocation9 + $0x20] sm:$0xf]
        %v719 = vld [vmem:[#allocation9 + $0x24] sm:$0xf]
        %v720 = vld [vmem:[#allocation9 + $0x28] sm:$0xf]
        %v721 = vld [vmem:[#allocation9 + $0x2c] sm:$0xf]
        %v722 = vld [vmem:[#allocation9 + $0x30] sm:$0xf]
        %v723 = vld [vmem:[#allocation9 + $0x34] sm:$0xf]
        %v724 = vld [vmem:[#allocation9 + $0x38] sm:$0xf]
        %v725 = vld [vmem:[#allocation9 + $0x3c] sm:$0xf]
        %v726 = vld [vmem:[#allocation3 + $0x8] sm:$0x1]
        %s727 = scalar_lea.vmem [#allocation9], 64
        %v728 = vld [vmem:[%s727] sm:$0xf]
        %v729 = vld [vmem:[%s727 + $0x4] sm:$0xf]
        %v730 = vld [vmem:[%s727 + $0x8] sm:$0xf]
        %v731 = vld [vmem:[%s727 + $0xc] sm:$0xf]
        %v732 = vld [vmem:[%s727 + $0x10] sm:$0xf]
        %v733 = vld [vmem:[%s727 + $0x14] sm:$0xf]
        %v734 = vld [vmem:[%s727 + $0x18] sm:$0xf]
        %v735 = vld [vmem:[%s727 + $0x1c] sm:$0xf]
        %v736 = vld [vmem:[%s727 + $0x20] sm:$0xf]
        %v737 = vld [vmem:[%s727 + $0x24] sm:$0xf]
        %v738 = vld [vmem:[%s727 + $0x28] sm:$0xf]
        %v739 = vld [vmem:[%s727 + $0x2c] sm:$0xf]
        %v740 = vld [vmem:[%s727 + $0x30] sm:$0xf]
        %v741 = vld [vmem:[%s727 + $0x34] sm:$0xf]
        %v742 = vld [vmem:[%s727 + $0x38] sm:$0xf]
        %v743 = vld [vmem:[%s727 + $0x3c] sm:$0xf]
        %v747 = vunpack.c.l.b16 %v708
        %v748 = vunpack.c.l.b16 %v709
        %v749 = vunpack.c.l.b16 %v726
        %v750 = vpack.c.b16 %v748, %v747
        %v751 = vpack.c.b16 %v749, %v749
        %v753 = vshrl.u32 %v750, 16
        %v755 = vshll.u32 %v750, 16
        %v757 = vrot.slane %v755, 1
        %v758 = vor.u32 %v753, %v757
        %v760 = vshll.u32 %v751, 16
        %v762 = vrot.slane %v760, 1
        %v763 = vsel %vm471, %v758, %v762
        %v781 = vunpack.c.l.b16 %v728
        %v782 = vunpack.c.l.b16 %v729
        %v783 = vunpack.c.l.b16 %v730
        %v784 = vunpack.c.l.b16 %v731
        %v785 = vunpack.c.l.b16 %v732
        %v786 = vunpack.c.l.b16 %v733
        %v787 = vunpack.c.l.b16 %v734
        %v788 = vunpack.c.l.b16 %v735
        %v789 = vunpack.c.l.b16 %v736
        %v790 = vunpack.c.l.b16 %v737
        %v791 = vunpack.c.l.b16 %v738
        %v792 = vunpack.c.l.b16 %v739
        %v793 = vunpack.c.l.b16 %v740
        %v794 = vunpack.c.l.b16 %v741
        %v795 = vunpack.c.l.b16 %v742
        %v796 = vunpack.c.l.b16 %v743
        %v797 = vpack.c.b16 %v782, %v781
        %v798 = vpack.c.b16 %v784, %v783
        %v799 = vpack.c.b16 %v786, %v785
        %v800 = vpack.c.b16 %v788, %v787
        %v801 = vpack.c.b16 %v790, %v789
        %v802 = vpack.c.b16 %v792, %v791
        %v803 = vpack.c.b16 %v794, %v793
        %v804 = vpack.c.b16 %v796, %v795
        %813 = vmatprep.subr.bf16.mxu0 0
        %814 = vmatpush1.bf16.msra.mxu0 %v797
        %815 = vmatprep.subr.bf16.mxu0 0
        %816 = vmatpush1.bf16.msra.mxu0 %v798
        %817 = vmatprep.subr.bf16.mxu0 0
        %818 = vmatpush1.bf16.msra.mxu0 %v799
        %819 = vmatprep.subr.bf16.mxu0 0
        %820 = vmatpush1.bf16.msra.mxu0 %v800
        %821 = vmatprep.subr.bf16.mxu0 0
        %822 = vmatpush1.bf16.msra.mxu0 %v801
        %823 = vmatprep.subr.bf16.mxu0 0
        %824 = vmatpush1.bf16.msra.mxu0 %v802
        %825 = vmatprep.subr.bf16.mxu0 0
        %826 = vmatpush1.bf16.msra.mxu0 %v803
        %827 = vmatprep.subr.bf16.mxu0 0
        %828 = vmatpush1.bf16.msra.mxu0 %v804
        %829 = vmatprep.subr.bf16.mxu0 0
        %830 = vmatpush1.bf16.msra.mxu0 0
        %831 = vmatprep.subr.bf16.mxu0 0
        %832 = vmatpush1.bf16.msra.mxu0 0
        %833 = vmatprep.subr.bf16.mxu0 0
        %834 = vmatpush1.bf16.msra.mxu0 0
        %835 = vmatprep.subr.bf16.mxu0 0
        %836 = vmatpush1.bf16.msra.mxu0 0
        %837 = vmatprep.subr.bf16.mxu0 0
        %838 = vmatpush1.bf16.msra.mxu0 0
        %839 = vmatprep.subr.bf16.mxu0 0
        %840 = vmatpush1.bf16.msra.mxu0 0
        %841 = vmatprep.subr.bf16.mxu0 0
        %842 = vmatpush1.bf16.msra.mxu0 0
        %843 = vmatprep.subr.bf16.mxu0 0
        %844 = vmatpush1.bf16.msra.mxu0 0
        %845 = vmatprep.mubr.bf16.mxu0 0
        %846 = vmatmul.mubr.bf16.gmra.mrb[0].mxu0 %v763
        %v847 = vpop.f32.mrb[0].mxu0
        %v848 = vadd.f32 0.0, %v847
        %v849 = vpop.f32.mrb[0].mxu0
        %v850 = vpop.f32.mrb[0].mxu0
        %v851 = vadd.f32 0.0, %v850
        %v852 = vpop.f32.mrb[0].mxu0
        %853 = vdwg.mxu0
        %v871 = vunpack.c.l.b16 %v710
        %v872 = vunpack.c.l.b16 %v711
        %v873 = vunpack.c.l.b16 %v712
        %v874 = vunpack.c.l.b16 %v713
        %v875 = vunpack.c.l.b16 %v714
        %v876 = vunpack.c.l.b16 %v715
        %v877 = vunpack.c.l.b16 %v716
        %v878 = vunpack.c.l.b16 %v717
        %v879 = vunpack.c.l.b16 %v718
        %v880 = vunpack.c.l.b16 %v719
        %v881 = vunpack.c.l.b16 %v720
        %v882 = vunpack.c.l.b16 %v721
        %v883 = vunpack.c.l.b16 %v722
        %v884 = vunpack.c.l.b16 %v723
        %v885 = vunpack.c.l.b16 %v724
        %v886 = vunpack.c.l.b16 %v725
        %v887 = vpack.c.b16 %v872, %v871
        %v888 = vpack.c.b16 %v874, %v873
        %v889 = vpack.c.b16 %v876, %v875
        %v890 = vpack.c.b16 %v878, %v877
        %v891 = vpack.c.b16 %v880, %v879
        %v892 = vpack.c.b16 %v882, %v881
        %v893 = vpack.c.b16 %v884, %v883
        %v894 = vpack.c.b16 %v886, %v885
        %903 = vmatprep.subr.bf16.mxu0 0
        %904 = vmatpush1.bf16.msra.mxu0 %v887
        %905 = vmatprep.subr.bf16.mxu0 0
        %906 = vmatpush1.bf16.msra.mxu0 %v888
        %907 = vmatprep.subr.bf16.mxu0 0
        %908 = vmatpush1.bf16.msra.mxu0 %v889
        %909 = vmatprep.subr.bf16.mxu0 0
        %910 = vmatpush1.bf16.msra.mxu0 %v890
        %911 = vmatprep.subr.bf16.mxu0 0
        %912 = vmatpush1.bf16.msra.mxu0 %v891
        %913 = vmatprep.subr.bf16.mxu0 0
        %914 = vmatpush1.bf16.msra.mxu0 %v892
        %915 = vmatprep.subr.bf16.mxu0 0
        %916 = vmatpush1.bf16.msra.mxu0 %v893
        %917 = vmatprep.subr.bf16.mxu0 0
        %918 = vmatpush1.bf16.msra.mxu0 %v894
        %919 = vmatprep.subr.bf16.mxu0 0
        %920 = vmatpush1.bf16.msra.mxu0 0
        %921 = vmatprep.subr.bf16.mxu0 0
        %922 = vmatpush1.bf16.msra.mxu0 0
        %923 = vmatprep.subr.bf16.mxu0 0
        %924 = vmatpush1.bf16.msra.mxu0 0
        %925 = vmatprep.subr.bf16.mxu0 0
        %926 = vmatpush1.bf16.msra.mxu0 0
        %927 = vmatprep.subr.bf16.mxu0 0
        %928 = vmatpush1.bf16.msra.mxu0 0
        %929 = vmatprep.subr.bf16.mxu0 0
        %930 = vmatpush1.bf16.msra.mxu0 0
        %931 = vmatprep.subr.bf16.mxu0 0
        %932 = vmatpush1.bf16.msra.mxu0 0
        %933 = vmatprep.subr.bf16.mxu0 0
        %934 = vmatpush1.bf16.msra.mxu0 0
        %935 = vmatprep.mubr.bf16.mxu0 0
        %936 = vmatmul.mubr.bf16.gmra.mrb[0].mxu0 %v750
        %v937 = vpop.f32.mrb[0].mxu0
        %v938 = vadd.f32 %v848, %v937
        %v939 = vpop.f32.mrb[0].mxu0
        %v940 = vpop.f32.mrb[0].mxu0
        %v941 = vadd.f32 %v851, %v940
        %v942 = vpop.f32.mrb[0].mxu0
        %943 = vdwg.mxu0
        %v944 = vld [vmem:[%s4] sm:$0x1]
        %v946 = vlaneseq
        %v947 = vshrl.u32 %v946, 7
        %v948 = vsub.s32 0, %v947
        %v949 = vrot.slane %v944, %v948
        %v951 = vadd.f32 %v938, %v949
        %v952 = vadd.f32 %v941, %v949
        %v953 = vmax.f32 %v951, 0.0
        %v954 = vmax.f32 %v952, 0.0
        %v955 = vld [vmem:[#allocation10] sm:$0xf]
        %v956 = vld [vmem:[#allocation10 + $0x4] sm:$0xf]
        %v957 = vld [vmem:[#allocation10 + $0x8] sm:$0xf]
        %v958 = vld [vmem:[#allocation10 + $0xc] sm:$0xf]
        %v959 = vld [vmem:[#allocation10 + $0x10] sm:$0xf]
        %v960 = vld [vmem:[#allocation10 + $0x14] sm:$0xf]
        %v961 = vld [vmem:[#allocation10 + $0x18] sm:$0xf]
        %v962 = vld [vmem:[#allocation10 + $0x1c] sm:$0xf]
        %v963 = vld [vmem:[#allocation10 + $0x20] sm:$0xf]
        %v964 = vld [vmem:[#allocation10 + $0x24] sm:$0xf]
        %v965 = vld [vmem:[#allocation10 + $0x28] sm:$0xf]
        %v966 = vld [vmem:[#allocation10 + $0x2c] sm:$0xf]
        %v967 = vld [vmem:[#allocation10 + $0x30] sm:$0xf]
        %v968 = vld [vmem:[#allocation10 + $0x34] sm:$0xf]
        %v969 = vld [vmem:[#allocation10 + $0x38] sm:$0xf]
        %v970 = vld [vmem:[#allocation10 + $0x3c] sm:$0xf]
        %v971 = vld [vmem:[%s6] sm:$0x1]
        %v973 = vlaneseq
        %v974 = vshrl.u32 %v973, 7
        %v975 = vsub.s32 0, %v974
        %v976 = vrot.slane %v971, %v975
        %v980 = vunpack.c.l.b16 %v390
        %v981 = vunpack.c.l.b16 %v391
        %v982 = vpack.c.b16 %v981, %v980
        %v1000 = vunpack.c.l.b16 %v955
        %v1001 = vunpack.c.l.b16 %v956
        %v1002 = vunpack.c.l.b16 %v957
        %v1003 = vunpack.c.l.b16 %v958
        %v1004 = vunpack.c.l.b16 %v959
        %v1005 = vunpack.c.l.b16 %v960
        %v1006 = vunpack.c.l.b16 %v961
        %v1007 = vunpack.c.l.b16 %v962
        %v1008 = vunpack.c.l.b16 %v963
        %v1009 = vunpack.c.l.b16 %v964
        %v1010 = vunpack.c.l.b16 %v965
        %v1011 = vunpack.c.l.b16 %v966
        %v1012 = vunpack.c.l.b16 %v967
        %v1013 = vunpack.c.l.b16 %v968
        %v1014 = vunpack.c.l.b16 %v969
        %v1015 = vunpack.c.l.b16 %v970
        %v1016 = vpack.c.b16 %v1001, %v1000
        %v1017 = vpack.c.b16 %v1003, %v1002
        %v1018 = vpack.c.b16 %v1005, %v1004
        %v1019 = vpack.c.b16 %v1007, %v1006
        %v1020 = vpack.c.b16 %v1009, %v1008
        %v1021 = vpack.c.b16 %v1011, %v1010
        %v1022 = vpack.c.b16 %v1013, %v1012
        %v1023 = vpack.c.b16 %v1015, %v1014
        %1032 = vmatprep.subr.bf16.mxu0 0
        %1033 = vmatpush1.bf16.msra.mxu0 %v1016
        %1034 = vmatprep.subr.bf16.mxu0 0
        %1035 = vmatpush1.bf16.msra.mxu0 %v1017
        %1036 = vmatprep.subr.bf16.mxu0 0
        %1037 = vmatpush1.bf16.msra.mxu0 %v1018
        %1038 = vmatprep.subr.bf16.mxu0 0
        %1039 = vmatpush1.bf16.msra.mxu0 %v1019
        %1040 = vmatprep.subr.bf16.mxu0 0
        %1041 = vmatpush1.bf16.msra.mxu0 %v1020
        %1042 = vmatprep.subr.bf16.mxu0 0
        %1043 = vmatpush1.bf16.msra.mxu0 %v1021
        %1044 = vmatprep.subr.bf16.mxu0 0
        %1045 = vmatpush1.bf16.msra.mxu0 %v1022
        %1046 = vmatprep.subr.bf16.mxu0 0
        %1047 = vmatpush1.bf16.msra.mxu0 %v1023
        %1048 = vmatprep.subr.bf16.mxu0 0
        %1049 = vmatpush1.bf16.msra.mxu0 0
        %1050 = vmatprep.subr.bf16.mxu0 0
        %1051 = vmatpush1.bf16.msra.mxu0 0
        %1052 = vmatprep.subr.bf16.mxu0 0
        %1053 = vmatpush1.bf16.msra.mxu0 0
        %1054 = vmatprep.subr.bf16.mxu0 0
        %1055 = vmatpush1.bf16.msra.mxu0 0
        %1056 = vmatprep.subr.bf16.mxu0 0
        %1057 = vmatpush1.bf16.msra.mxu0 0
        %1058 = vmatprep.subr.bf16.mxu0 0
        %1059 = vmatpush1.bf16.msra.mxu0 0
        %1060 = vmatprep.subr.bf16.mxu0 0
        %1061 = vmatpush1.bf16.msra.mxu0 0
        %1062 = vmatprep.subr.bf16.mxu0 0
        %1063 = vmatpush1.bf16.msra.mxu0 0
        %1064 = vmatprep.mubr.bf16.mxu0 0
        %1065 = vmatmul.mubr.bf16.gmra.mrb[0].mxu0 %v982
        %v1066 = vpop.f32.mrb[0].mxu0
        %v1067 = vadd.f32 %v976, %v1066
        %v1068 = vpop.f32.mrb[0].mxu0
        %v1069 = vpop.f32.mrb[0].mxu0
        %v1070 = vadd.f32 %v976, %v1069
        %v1071 = vpop.f32.mrb[0].mxu0
        %1072 = vdwg.mxu0
        %v1073 = vadd.f32 %v953, %v1067
        %v1074 = vadd.f32 %v954, %v1070
        %v1075 = vmax.f32 %v1073, 0.0
        %v1076 = vmax.f32 %v1074, 0.0
        %v1077 = vpack.c.bf16 %v1076, %v1075
        %v1079 = vunpack.c.l.b16 %v1077
        %v1080 = vunpack.c.h.b16 %v1077
        %v1081 = vpack.c.b16 %v1079, %v1079
        %v1082 = vpack.c.b16 %v1080, %v1080
        %1085 = vst [vmem:[%s358] sm:$0xf] %v1081
        %1086 = vst [vmem:[%s358 + $0x4] sm:$0xf] %v1082
        %s1087 = sand.u32 %s202, 1
        %s1088 = scalar_lea.sflag [#allocation6], %s1087
        %s1089 = sand.u32 %s202, 1
        %s1090 = smul.addr %s1089, 8
        %s1091 = scalar_lea.vmem [#allocation12], %s1090
        // Predicated region
        $region73: #{tpu_custom_call.1} parent=47 // pred_check
          %p1092 = pneg %p212
        $region74: #{tpu_custom_call.1} parent=47 // pred_check_branch
          %1094 = sbr.rel (%p1092) target = $region76
        $region75: #{tpu_custom_call.1} parent=47 // pred_region
          %s1095 = smul.u32 2, %s31
          %s1097 = ssub.s32 128, 128
          %1098 = vsyncadd %s1088, %s1097
          %s1099 = smul.addr %s30, 8
          %s1100 = sadd.s32 %s1095, %s1099
          %s1101 = smul.addr %s1100, 64
          %s1102 = scalar_lea.hbm %s7, %s1101
          %s1103 = sshll.u32 %s1091, 4
          %s1104 = int_to_ptr.vmem [resolvable:$true] %s1103
          %1109 = dma.vmem_to_hbm [thread:$0]  %s1104, 128, %s1102, %s1088, 64, 64, 4
        $region76: #{tpu_custom_call.1} parent=47 // pred_fallthru
          _
      $region48: #{tpu_custom_call.1} parent=5 // pred_fallthru
        _
      %p1110 = scmp.le.s32.totalorder 2, %s21
      // Predicated region
      $region77: #{tpu_custom_call.1} parent=5 // pred_check
        %p1111 = pneg %p1110
      $region78: #{tpu_custom_call.1} parent=5 // pred_check_branch
        %1113 = sbr.rel (%p1111) target = $region80
      $region79: #{tpu_custom_call.1} parent=5 // pred_region
        %s1114 = ssub.s32 %s21, 2
        // Predicated region
        $region81: #{tpu_custom_call.1} parent=79 // pred_check
          %p1115 = pneg %p218
        $region82: #{tpu_custom_call.1} parent=79 // pred_check_branch
          %1117 = sbr.rel (%p1115) target = $region84
        $region83: #{tpu_custom_call.1} parent=79 // pred_region
          %s1118 = sand.u32 %s203, 1
          %s1119 = scalar_lea.sflag [#allocation6], %s1118
          %s1120 = sand.u32 %s203, 1
          %s1121 = smul.addr %s1120, 8
          %s1122 = scalar_lea.vmem [#allocation12], %s1121
          %1123 = dma.done %s1119, 128
        $region84: #{tpu_custom_call.1} parent=79 // pred_fallthru
          _
      $region80: #{tpu_custom_call.1} parent=5 // pred_fallthru
        _
    $region6: #{tpu_custom_call.1} parent=1 // loop_footer
      %s25 = sadd.s32 1, %s21
    $region7: #{tpu_custom_call.1} parent=1 // loop_footer_branch
      %20 = sbr.rel target = $region3
    $region8: #{tpu_custom_call.1} parent=1 // loop_exit
      _
    %1124 = vsyncpa [#allocation5], 1
    %s1125 = scalar_lea.sflag [#allocation5], 1
    %1126 = vsyncpa %s1125, 1
    %1127 = vsyncpa [#allocation8], 1
    %1128 = vsyncpa [#allocation11], 1
    %1129 = vsyncpa [#allocation6], 1
    %s1130 = scalar_lea.sflag [#allocation6], 1
    %1131 = vsyncpa %s1130, 1

</llo_original>
